<compile_context>
chip_gen: v7x
topology: tpu7x:2x2x1
jax: 0.10.0
libtpu: 0.0.40
codegen_flags: <defaults>
</compile_context>

<pallas_src>
import functools

import jax
import jax.numpy as jnp
from jax.experimental import pallas as pl
from jax.experimental.pallas import tpu as pltpu

H1, H2 = 150, 100          # logical hidden dims (match the PyTorch module)
LANES = 128
SUBLANES = 8


def _round_up(n, m):
    return ((n + m - 1) // m) * m


def dqn_kernel(x_ref, w1_ref, b1_ref, w2_ref, b2_ref, w3_ref, b3_ref, o_ref):
    # Layer 1: Linear(F, 150->256 padded) + ReLU.  K (=F) is tiny; the MXU has
    # slack here so we deliberately do NOT pad the contraction axis.
    h1 = jnp.dot(x_ref[...], w1_ref[...], preferred_element_type=jnp.float32)
    h1 = jnp.maximum(h1 + b1_ref[...], 0.0)

    # Layer 2: Linear(150->256, 100->128 padded) + ReLU.  Padded columns of h1
    # are exactly zero (0*W + 0 bias, ReLU(0)=0), so the math is unchanged.
    h2 = jnp.dot(h1, w2_ref[...], preferred_element_type=jnp.float32)
    h2 = jnp.maximum(h2 + b2_ref[...], 0.0)

    # Layer 3: Linear(100->128, out->128 padded), no activation.  Lane-dense
    # output slab -> unmasked vst on the store path.
    out = jnp.dot(h2, w3_ref[...], preferred_element_type=jnp.float32)
    o_ref[...] = (out + b3_ref[...]).astype(o_ref.dtype)


def pad_params(params):
    """Zero-pad weights/biases to 128-lane multiples (one-time, offline).

    Safe because padded rows/cols are exactly zero and ReLU(0) = 0; the caller
    slices the padded output back to the real out_dim."""
    w1, b1, w2, b2, w3, b3 = params
    f = w1.shape[0]
    out_dim = w3.shape[1]
    h1p = _round_up(H1, LANES)       # 150 -> 256
    h2p = _round_up(H2, LANES)       # 100 -> 128
    op = _round_up(out_dim, LANES)   # e.g. 4 -> 128

    def pad2(a, rows, cols):
        return jnp.pad(a, ((0, rows - a.shape[0]), (0, cols - a.shape[1])))

    return (
        pad2(w1, f, h1p), pad2(b1, 1, h1p),
        pad2(w2, h1p, h2p), pad2(b2, 1, h2p),
        pad2(w3, h2p, op), pad2(b3, 1, op),
    )


@functools.partial(jax.jit, static_argnames=("block_b",))
def dqn_forward(x, params, *, block_b=512):
    """Batched DQN forward.  x: [B, F] f32; params: unpadded (w1,b1,...,w3,b3)."""
    out_dim = params[4].shape[1]
    w1, b1, w2, b2, w3, b3 = pad_params(params)
    b, f = x.shape
    h1p, h2p, op = w1.shape[1], w2.shape[1], w3.shape[1]

    # Batch tile: large enough to pipeline (review: 512+ ~ roofline), never
    # larger than the (sublane-rounded) batch itself.
    tb = min(block_b, _round_up(b, SUBLANES))
    b_pad = _round_up(b, tb)
    if b_pad != b:
        x = jnp.pad(x, ((0, b_pad - b), (0, 0)))
    grid = (b_pad // tb,)

    flops = 2 * b_pad * (f * h1p + h1p * h2p + h2p * op)
    bytes_accessed = 4 * (
        b_pad * (f + op)                                   # x in, out written
        + f * h1p + h1p + h1p * h2p + h2p + h2p * op + op  # weights + biases
    )

    out_padded = pl.pallas_call(
        dqn_kernel,
        out_shape=jax.ShapeDtypeStruct((b_pad, op), jnp.float32),
        grid=grid,
        in_specs=[
            pl.BlockSpec((tb, f), lambda i: (i, 0)),    # x: tiled over batch
            pl.BlockSpec((f, h1p), lambda i: (0, 0)),   # weights/biases stay
            pl.BlockSpec((1, h1p), lambda i: (0, 0)),   # resident in VMEM
            pl.BlockSpec((h1p, h2p), lambda i: (0, 0)),
            pl.BlockSpec((1, h2p), lambda i: (0, 0)),
            pl.BlockSpec((h2p, op), lambda i: (0, 0)),
            pl.BlockSpec((1, op), lambda i: (0, 0)),
        ],
        out_specs=pl.BlockSpec((tb, op), lambda i: (i, 0)),
        compiler_params=pltpu.CompilerParams(
            dimension_semantics=("parallel",),   # v7x: shard batch over 2 TCs
            vmem_limit_bytes=64 << 20,
        ),
        cost_estimate=pl.CostEstimate(
            flops=flops, transcendentals=0, bytes_accessed=bytes_accessed),
    )(x, w1, b1, w2, b2, w3, b3)

    # Slice away batch padding and the lane-padded output columns.
    return out_padded[:b, :out_dim]


def init_dqn_params(key, input_num, output_num):
    """Deterministic init matching PyTorch nn.Linear default:
    uniform(-1/sqrt(fan_in), 1/sqrt(fan_in)) for weights and biases."""
    dims = [(input_num, H1), (H1, H2), (H2, output_num)]
    params = []
    for fan_in, fan_out in dims:
        key, kw, kb = jax.random.split(key, 3)
        bound = 1.0 / jnp.sqrt(fan_in)
        w = jax.random.uniform(kw, (fan_in, fan_out), jnp.float32, -bound, bound)
        b = jax.random.uniform(kb, (1, fan_out), jnp.float32, -bound, bound)
        params += [w, b]
    return tuple(params)


def dqn_reference(x, params):
    """Plain-JAX reference of the PyTorch forward, for verification."""
    w1, b1, w2, b2, w3, b3 = params
    h1 = jnp.maximum(x @ w1 + b1, 0.0)
    h2 = jnp.maximum(h1 @ w2 + b2, 0.0)
    return h2 @ w3 + b3


if __name__ == "__main__":
    key = jax.random.PRNGKey(0)
    key, kx, kp, kx2 = jax.random.split(key, 4)

    input_num = 8      # small state dim (e.g. a gym observation vector)
    output_num = 4     # small action space
    params = init_dqn_params(kp, input_num, output_num)

    # Small per-step-style batch.  (NOTE: at batch=2 the call is pure launch
    # overhead; the kernel pays off at replay-buffer batches via the grid.)
    x_small = jax.random.normal(kx, (2, input_num), dtype=jnp.float32)
    out_small = jax.block_until_ready(dqn_forward(x_small, params))
    ref_small = dqn_reference(x_small, params)
    assert out_small.shape == (2, output_num)
    assert jnp.allclose(out_small, ref_small, atol=1e-5, rtol=1e-5), \
        "small-batch mismatch vs reference"

    # Slightly larger batch with a small tile to exercise a multi-step grid
    # (non-divisible batch -> padded + sliced).
    x_big = jax.random.normal(kx2, (70, input_num), dtype=jnp.float32)
    out_big = jax.block_until_ready(dqn_forward(x_big, params, block_b=16))
    ref_big = dqn_reference(x_big, params)
    assert out_big.shape == (70, output_num)
    assert jnp.allclose(out_big, ref_big, atol=1e-5, rtol=1e-5), \
        "batched-grid mismatch vs reference"

    print("KERNEL_OK")
</pallas_src>

<mosaic_0001>
module attributes {stable_mosaic.version = 11 : i64} {
  func.func @dqn_kernel(%arg0: i32, %arg1: memref<8x8xf32, #tpu.memory_space<vmem>>, %arg2: memref<8x256xf32, #tpu.memory_space<vmem>>, %arg3: memref<1x256xf32, #tpu.memory_space<vmem>>, %arg4: memref<256x128xf32, #tpu.memory_space<vmem>>, %arg5: memref<1x128xf32, #tpu.memory_space<vmem>>, %arg6: memref<128x128xf32, #tpu.memory_space<vmem>>, %arg7: memref<1x128xf32, #tpu.memory_space<vmem>>, %arg8: memref<8x128xf32, #tpu.memory_space<vmem>>) attributes {dimension_semantics = [#tpu.dimension_semantics<parallel>], iteration_bounds = array<i64: 1>, scalar_prefetch = 0 : i64, scratch_operands = 0 : i64, tpu.core_type = #tpu.core_type<tc>, window_params = [{transform_indices = @transform_0, window_bounds = array<i64: 8, 8>}, {pipeline_mode = #tpu.pipeline_mode<synchronous>, transform_indices = @transform_1, window_bounds = array<i64: 8, 256>}, {pipeline_mode = #tpu.pipeline_mode<synchronous>, transform_indices = @transform_2, window_bounds = array<i64: 1, 256>}, {pipeline_mode = #tpu.pipeline_mode<synchronous>, transform_indices = @transform_3, window_bounds = array<i64: 256, 128>}, {pipeline_mode = #tpu.pipeline_mode<synchronous>, transform_indices = @transform_4, window_bounds = array<i64: 1, 128>}, {pipeline_mode = #tpu.pipeline_mode<synchronous>, transform_indices = @transform_5, window_bounds = array<i64: 128, 128>}, {pipeline_mode = #tpu.pipeline_mode<synchronous>, transform_indices = @transform_6, window_bounds = array<i64: 1, 128>}, {transform_indices = @transform_7, window_bounds = array<i64: 8, 128>}]} {
    %c0 = arith.constant 0 : index
    %c0_0 = arith.constant 0 : index
    %0 = vector.load %arg1[%c0, %c0_0] : memref<8x8xf32, #tpu.memory_space<vmem>>, vector<8x8xf32>
    %c0_1 = arith.constant 0 : index
    %c0_2 = arith.constant 0 : index
    %1 = vector.load %arg2[%c0_1, %c0_2] : memref<8x256xf32, #tpu.memory_space<vmem>>, vector<8x256xf32>
    %cst = arith.constant dense<0.000000e+00> : vector<8x256xf32>
    %2 = tpu.matmul %0, %1, %cst {dimension_numbers = #tpu.dot_dimension_numbers<[1], [0], [0], [1], [0, 0, 1, 1], [], []>} : vector<8x8xf32>, vector<8x256xf32>, vector<8x256xf32> -> vector<8x256xf32>
    %c0_3 = arith.constant 0 : index
    %c0_4 = arith.constant 0 : index
    %3 = vector.load %arg3[%c0_3, %c0_4] : memref<1x256xf32, #tpu.memory_space<vmem>>, vector<1x256xf32>
    %4 = vector.broadcast %3 : vector<1x256xf32> to vector<8x256xf32>
    %5 = arith.addf %2, %4 : vector<8x256xf32>
    %cst_5 = arith.constant 0.000000e+00 : f32
    %6 = vector.broadcast %cst_5 : f32 to vector<8x256xf32>
    %7 = arith.maximumf %5, %6 : vector<8x256xf32>
    %c0_6 = arith.constant 0 : index
    %c0_7 = arith.constant 0 : index
    %8 = vector.load %arg4[%c0_6, %c0_7] : memref<256x128xf32, #tpu.memory_space<vmem>>, vector<256x128xf32>
    %cst_8 = arith.constant dense<0.000000e+00> : vector<8x128xf32>
    %9 = tpu.matmul %7, %8, %cst_8 {dimension_numbers = #tpu.dot_dimension_numbers<[1], [0], [0], [1], [0, 0, 1, 1], [], []>} : vector<8x256xf32>, vector<256x128xf32>, vector<8x128xf32> -> vector<8x128xf32>
    %c0_9 = arith.constant 0 : index
    %c0_10 = arith.constant 0 : index
    %10 = vector.load %arg5[%c0_9, %c0_10] : memref<1x128xf32, #tpu.memory_space<vmem>>, vector<1x128xf32>
    %11 = vector.broadcast %10 : vector<1x128xf32> to vector<8x128xf32>
    %12 = arith.addf %9, %11 : vector<8x128xf32>
    %cst_11 = arith.constant 0.000000e+00 : f32
    %13 = vector.broadcast %cst_11 : f32 to vector<8x128xf32>
    %14 = arith.maximumf %12, %13 : vector<8x128xf32>
    %c0_12 = arith.constant 0 : index
    %c0_13 = arith.constant 0 : index
    %15 = vector.load %arg6[%c0_12, %c0_13] : memref<128x128xf32, #tpu.memory_space<vmem>>, vector<128x128xf32>
    %cst_14 = arith.constant dense<0.000000e+00> : vector<8x128xf32>
    %16 = tpu.matmul %14, %15, %cst_14 {dimension_numbers = #tpu.dot_dimension_numbers<[1], [0], [0], [1], [0, 0, 1, 1], [], []>} : vector<8x128xf32>, vector<128x128xf32>, vector<8x128xf32> -> vector<8x128xf32>
    %c0_15 = arith.constant 0 : index
    %c0_16 = arith.constant 0 : index
    %17 = vector.load %arg7[%c0_15, %c0_16] : memref<1x128xf32, #tpu.memory_space<vmem>>, vector<1x128xf32>
    %18 = vector.broadcast %17 : vector<1x128xf32> to vector<8x128xf32>
    %19 = arith.addf %16, %18 : vector<8x128xf32>
    %c0_17 = arith.constant 0 : index
    %c0_18 = arith.constant 0 : index
    %20 = vector.load %arg8[%c0_17, %c0_18] : memref<8x128xf32, #tpu.memory_space<vmem>>, vector<8x128xf32>
    tpu.vector_store %arg8[%c0_17, %c0_18], %19 {strides = array<i32>} : memref<8x128xf32, #tpu.memory_space<vmem>>, vector<8x128xf32>,
    return
  }
  func.func @transform_0(%arg0: i32) -> (i32, i32) {
    %c0_i32 = arith.constant 0 : i32
    %c0_i32_0 = arith.constant 0 : i32
    return %arg0, %c0_i32 : i32, i32
  }
  func.func @transform_1(%arg0: i32) -> (i32, i32) {
    %c0_i32 = arith.constant 0 : i32
    %c0_i32_0 = arith.constant 0 : i32
    %c0_i32_1 = arith.constant 0 : i32
    return %c0_i32, %c0_i32_0 : i32, i32
  }
  func.func @transform_2(%arg0: i32) -> (i32, i32) {
    %c0_i32 = arith.constant 0 : i32
    %c0_i32_0 = arith.constant 0 : i32
    %c0_i32_1 = arith.constant 0 : i32
    return %c0_i32, %c0_i32_0 : i32, i32
  }
  func.func @transform_3(%arg0: i32) -> (i32, i32) {
    %c0_i32 = arith.constant 0 : i32
    %c0_i32_0 = arith.constant 0 : i32
    %c0_i32_1 = arith.constant 0 : i32
    return %c0_i32, %c0_i32_0 : i32, i32
  }
  func.func @transform_4(%arg0: i32) -> (i32, i32) {
    %c0_i32 = arith.constant 0 : i32
    %c0_i32_0 = arith.constant 0 : i32
    %c0_i32_1 = arith.constant 0 : i32
    return %c0_i32, %c0_i32_0 : i32, i32
  }
  func.func @transform_5(%arg0: i32) -> (i32, i32) {
    %c0_i32 = arith.constant 0 : i32
    %c0_i32_0 = arith.constant 0 : i32
    %c0_i32_1 = arith.constant 0 : i32
    return %c0_i32, %c0_i32_0 : i32, i32
  }
  func.func @transform_6(%arg0: i32) -> (i32, i32) {
    %c0_i32 = arith.constant 0 : i32
    %c0_i32_0 = arith.constant 0 : i32
    %c0_i32_1 = arith.constant 0 : i32
    return %c0_i32, %c0_i32_0 : i32, i32
  }
  func.func @transform_7(%arg0: i32) -> (i32, i32) {
    %c0_i32 = arith.constant 0 : i32
    %c0_i32_0 = arith.constant 0 : i32
    return %arg0, %c0_i32 : i32, i32
  }
}

</mosaic_0001>

<llo_original>
// kernel: dqn_forward.1
$region0: #{dqn_forward.1}
  #allocation0 [shape = 'u32[]', space=smem, size = 0x4, offset = 0x4, fixed_abs, tag = 'smem constant byte address 0x4 - core index']
  #allocation1 [shape = 'u32[144,128]{1,0:T(1,128)}', space=vmem, size = 0x12000, scoped, tag = 'internal scratch']
  %s0 = inlined_call_operand.hbm [shape: f32[8,8], index: 0, kind: input, shape index: {}]
  %s1 = inlined_call_operand.hbm [shape: f32[8,256], index: 1, kind: input, shape index: {}]
  %s2 = inlined_call_operand.hbm [shape: f32[1,256], index: 2, kind: input, shape index: {}]
  %s3 = inlined_call_operand.hbm [shape: f32[256,128], index: 3, kind: input, shape index: {}]
  %s4 = inlined_call_operand.hbm [shape: f32[1,128], index: 4, kind: input, shape index: {}]
  %s5 = inlined_call_operand.hbm [shape: f32[128,128], index: 5, kind: input, shape index: {}]
  %s6 = inlined_call_operand.hbm [shape: f32[1,128], index: 6, kind: input, shape index: {}]
  %s7 = inlined_call_operand.hbm [shape: f32[8,128], index: 7, kind: output, shape index: {}]
  %s8 = sld [smem:[#allocation0]]
  $region66: #{dqn_forward.1} parent=0
    _
  %s10 = ssub.s32 1, %s8
  %s11 = scalar_select 0, %s10, %s8
  $region1: #{dqn_forward.1} parent=0
    #allocation2 [shape = 'u8[4096]{0}', space=vmem, size = 0x1000, scoped, tag = 'input window, operand 0, single buffered']
    #allocation3 [shape = 's32[1]{0}', space=sflag, size = 0x4, scoped, tag = 'scoped memory for dqn_forward.1']
    #allocation4 [shape = 's32[1]{0}', space=sflag, size = 0x4, scoped, tag = 'scoped memory for dqn_forward.1']
    #allocation5 [shape = 'u8[8192]{0}', space=vmem, size = 0x2000, scoped, tag = 'input window, operand 1, single buffered']
    #allocation6 [shape = 's32[1]{0}', space=sflag, size = 0x4, scoped, tag = 'scoped memory for dqn_forward.1']
    #allocation7 [shape = 'u8[1024]{0}', space=vmem, size = 0x400, scoped, tag = 'input window, operand 2, single buffered']
    #allocation8 [shape = 'u8[131072]{0}', space=vmem, size = 0x20000, scoped, tag = 'input window, operand 3, single buffered']
    #allocation9 [shape = 's32[1]{0}', space=sflag, size = 0x4, scoped, tag = 'scoped memory for dqn_forward.1']
    #allocation10 [shape = 'u8[512]{0}', space=vmem, size = 0x400, scoped, tag = 'input window, operand 4, single buffered']
    #allocation11 [shape = 'u8[65536]{0}', space=vmem, size = 0x10000, scoped, tag = 'input window, operand 5, single buffered']
    #allocation12 [shape = 's32[1]{0}', space=sflag, size = 0x4, scoped, tag = 'scoped memory for dqn_forward.1']
    #allocation13 [shape = 'u8[512]{0}', space=vmem, size = 0x400, scoped, tag = 'input window, operand 6, single buffered']
    #allocation14 [shape = 'u8[4096]{0}', space=vmem, size = 0x1000, scoped, tag = 'output window, operand 0, single buffered']
    %12 = vsyncpa [#allocation3], 0
    %13 = vsyncpa [#allocation6], 0
    %14 = vsyncpa [#allocation9], 0
    %15 = vsyncpa [#allocation12], 0
    %16 = vsyncpa [#allocation4], 0
    // Predicated region
    $region2: #{dqn_forward.1} parent=1 // pred_check
      _
    $region3: #{dqn_forward.1} parent=1 // pred_check_branch
      %18 = sbr.rel (0) target = $region5
    $region4: #{dqn_forward.1} parent=1 // pred_region
      %s20 = ssub.s32 128, 128
      %21 = vsyncadd [#allocation3], %s20
      %s23 = sshll.u32 [#allocation2], 4
      %s24 = int_to_ptr.vmem [resolvable:$true] %s23
      %26 = dma.hbm_to_vmem [thread:$0]  %s0, 128, %s24, [#allocation3]
    $region5: #{dqn_forward.1} parent=1 // pred_fallthru
      _
    // Predicated region
    $region6: #{dqn_forward.1} parent=1 // pred_check
      _
    $region7: #{dqn_forward.1} parent=1 // pred_check_branch
      %28 = sbr.rel (0) target = $region9
    $region8: #{dqn_forward.1} parent=1 // pred_region
      %s30 = ssub.s32 256, 256
      %31 = vsyncadd [#allocation6], %s30
      %s33 = sshll.u32 [#allocation5], 4
      %s34 = int_to_ptr.vmem [resolvable:$true] %s33
      %36 = dma.hbm_to_vmem [thread:$0]  %s1, 256, %s34, [#allocation6]
    $region9: #{dqn_forward.1} parent=1 // pred_fallthru
      _
    // Predicated region
    $region10: #{dqn_forward.1} parent=1 // pred_check
      _
    $region11: #{dqn_forward.1} parent=1 // pred_check_branch
      %38 = sbr.rel (0) target = $region13
    $region12: #{dqn_forward.1} parent=1 // pred_region
      %s40 = ssub.s32 32, 32
      %41 = vsyncadd [#allocation6], %s40
      %s43 = sshll.u32 [#allocation7], 4
      %s44 = int_to_ptr.vmem [resolvable:$true] %s43
      %46 = dma.hbm_to_vmem [thread:$0]  %s2, 32, %s44, [#allocation6]
    $region13: #{dqn_forward.1} parent=1 // pred_fallthru
      _
    // Predicated region
    $region14: #{dqn_forward.1} parent=1 // pred_check
      _
    $region15: #{dqn_forward.1} parent=1 // pred_check_branch
      %48 = sbr.rel (0) target = $region17
    $region16: #{dqn_forward.1} parent=1 // pred_region
      %s50 = ssub.s32 4096, 4096
      %51 = vsyncadd [#allocation9], %s50
      %s52 = sshll.u32 [#allocation8], 4
      %s53 = int_to_ptr.vmem [resolvable:$true] %s52
      %58 = dma.hbm_to_vmem [thread:$0]  %s3, 4096, %s53, [#allocation9], 128, 128, 8
    $region17: #{dqn_forward.1} parent=1 // pred_fallthru
      _
    // Predicated region
    $region18: #{dqn_forward.1} parent=1 // pred_check
      _
    $region19: #{dqn_forward.1} parent=1 // pred_check_branch
      %60 = sbr.rel (0) target = $region21
    $region20: #{dqn_forward.1} parent=1 // pred_region
      %s62 = ssub.s32 16, 16
      %63 = vsyncadd [#allocation9], %s62
      %s65 = sshll.u32 [#allocation10], 4
      %s66 = int_to_ptr.vmem [resolvable:$true] %s65
      %68 = dma.hbm_to_vmem [thread:$0]  %s4, 16, %s66, [#allocation9]
    $region21: #{dqn_forward.1} parent=1 // pred_fallthru
      _
    // Predicated region
    $region22: #{dqn_forward.1} parent=1 // pred_check
      _
    $region23: #{dqn_forward.1} parent=1 // pred_check_branch
      %70 = sbr.rel (0) target = $region25
    $region24: #{dqn_forward.1} parent=1 // pred_region
      %s72 = ssub.s32 2048, 2048
      %73 = vsyncadd [#allocation12], %s72
      %s74 = sshll.u32 [#allocation11], 4
      %s75 = int_to_ptr.vmem [resolvable:$true] %s74
      %80 = dma.hbm_to_vmem [thread:$0]  %s5, 2048, %s75, [#allocation12], 128, 128, 8
    $region25: #{dqn_forward.1} parent=1 // pred_fallthru
      _
    // Predicated region
    $region26: #{dqn_forward.1} parent=1 // pred_check
      _
    $region27: #{dqn_forward.1} parent=1 // pred_check_branch
      %82 = sbr.rel (0) target = $region29
    $region28: #{dqn_forward.1} parent=1 // pred_region
      %s84 = ssub.s32 16, 16
      %85 = vsyncadd [#allocation12], %s84
      %s87 = sshll.u32 [#allocation13], 4
      %s88 = int_to_ptr.vmem [resolvable:$true] %s87
      %90 = dma.hbm_to_vmem [thread:$0]  %s6, 16, %s88, [#allocation12]
    $region29: #{dqn_forward.1} parent=1 // pred_fallthru
      _
    // Predicated region
    $region30: #{dqn_forward.1} parent=1 // pred_check
      _
    $region31: #{dqn_forward.1} parent=1 // pred_check_branch
      %92 = sbr.rel (0) target = $region33
    $region32: #{dqn_forward.1} parent=1 // pred_region
      %93 = dma.done [#allocation3], 128
    $region33: #{dqn_forward.1} parent=1 // pred_fallthru
      _
    // Predicated region
    $region34: #{dqn_forward.1} parent=1 // pred_check
      _
    $region35: #{dqn_forward.1} parent=1 // pred_check_branch
      %95 = sbr.rel (0) target = $region37
    $region36: #{dqn_forward.1} parent=1 // pred_region
      %96 = dma.done [#allocation6], 256
    $region37: #{dqn_forward.1} parent=1 // pred_fallthru
      _
    // Predicated region
    $region38: #{dqn_forward.1} parent=1 // pred_check
      _
    $region39: #{dqn_forward.1} parent=1 // pred_check_branch
      %98 = sbr.rel (0) target = $region41
    $region40: #{dqn_forward.1} parent=1 // pred_region
      %99 = dma.done [#allocation6], 32
    $region41: #{dqn_forward.1} parent=1 // pred_fallthru
      _
    // Predicated region
    $region42: #{dqn_forward.1} parent=1 // pred_check
      _
    $region43: #{dqn_forward.1} parent=1 // pred_check_branch
      %101 = sbr.rel (0) target = $region45
    $region44: #{dqn_forward.1} parent=1 // pred_region
      %102 = dma.done [#allocation9], 4096
    $region45: #{dqn_forward.1} parent=1 // pred_fallthru
      _
    // Predicated region
    $region46: #{dqn_forward.1} parent=1 // pred_check
      _
    $region47: #{dqn_forward.1} parent=1 // pred_check_branch
      %104 = sbr.rel (0) target = $region49
    $region48: #{dqn_forward.1} parent=1 // pred_region
      %105 = dma.done [#allocation9], 16
    $region49: #{dqn_forward.1} parent=1 // pred_fallthru
      _
    // Predicated region
    $region50: #{dqn_forward.1} parent=1 // pred_check
      _
    $region51: #{dqn_forward.1} parent=1 // pred_check_branch
      %107 = sbr.rel (0) target = $region53
    $region52: #{dqn_forward.1} parent=1 // pred_region
      %108 = dma.done [#allocation12], 2048
    $region53: #{dqn_forward.1} parent=1 // pred_fallthru
      _
    // Predicated region
    $region54: #{dqn_forward.1} parent=1 // pred_check
      _
    $region55: #{dqn_forward.1} parent=1 // pred_check_branch
      %110 = sbr.rel (0) target = $region57
    $region56: #{dqn_forward.1} parent=1 // pred_region
      %111 = dma.done [#allocation12], 16
    $region57: #{dqn_forward.1} parent=1 // pred_fallthru
      _
    %v112 = vld [vmem:[#allocation2] sm:$0xff]
    %v113 = vld [vmem:[#allocation5] sm:$0xff]
    %v114 = vld [vmem:[#allocation5 + $0x8] sm:$0xff]
    %v115 = vld [vmem:[#allocation7] sm:$0x3]
    %v117 = vlaneseq
    %v118 = vshrl.u32 %v117, 7
    %v119 = vsub.s32 0, %v118
    %v120 = vrot.slane %v115, %v119
    %v121 = vlaneseq
    %v122 = vshrl.u32 %v121, 7
    %v123 = vsub.s32 1, %v122
    %v124 = vrot.slane %v115, %v123
    %vm127 = vcmask 64512
    %v129 = vsel %vm127, %v112, 0
    %131 = vmatprep.subr.mxu0 %v114
    %132 = vmatpush1.msra.mxu0 %v113
    %133 = vmatprep.subr.mxu0 0.0
    %134 = vmatpush1.msra.mxu0 0.0
    %135 = vmatprep.subr.mxu0 0.0
    %136 = vmatpush1.msra.mxu0 0.0
    %137 = vmatprep.subr.mxu0 0.0
    %138 = vmatpush1.msra.mxu0 0.0
    %139 = vmatprep.subr.mxu0 0.0
    %140 = vmatpush1.msra.mxu0 0.0
    %141 = vmatprep.subr.mxu0 0.0
    %142 = vmatpush1.msra.mxu0 0.0
    %143 = vmatprep.subr.mxu0 0.0
    %144 = vmatpush1.msra.mxu0 0.0
    %145 = vmatprep.subr.mxu0 0.0
    %146 = vmatpush1.msra.mxu0 0.0
    %147 = vmatprep.subr.mxu0 0.0
    %148 = vmatpush1.msra.mxu0 0.0
    %149 = vmatprep.subr.mxu0 0.0
    %150 = vmatpush1.msra.mxu0 0.0
    %151 = vmatprep.subr.mxu0 0.0
    %152 = vmatpush1.msra.mxu0 0.0
    %153 = vmatprep.subr.mxu0 0.0
    %154 = vmatpush1.msra.mxu0 0.0
    %155 = vmatprep.subr.mxu0 0.0
    %156 = vmatpush1.msra.mxu0 0.0
    %157 = vmatprep.subr.mxu0 0.0
    %158 = vmatpush1.msra.mxu0 0.0
    %159 = vmatprep.subr.mxu0 0.0
    %160 = vmatpush1.msra.mxu0 0.0
    %161 = vmatprep.subr.mxu0 0.0
    %162 = vmatpush1.msra.mxu0 0.0
    %163 = vmatprep.subr.mxu0 0.0
    %164 = vmatpush1.msra.mxu0 0.0
    %165 = vmatprep.subr.mxu0 0.0
    %166 = vmatpush1.msra.mxu0 0.0
    %167 = vmatprep.subr.mxu0 0.0
    %168 = vmatpush1.msra.mxu0 0.0
    %169 = vmatprep.subr.mxu0 0.0
    %170 = vmatpush1.msra.mxu0 0.0
    %171 = vmatprep.subr.mxu0 0.0
    %172 = vmatpush1.msra.mxu0 0.0
    %173 = vmatprep.subr.mxu0 0.0
    %174 = vmatpush1.msra.mxu0 0.0
    %175 = vmatprep.subr.mxu0 0.0
    %176 = vmatpush1.msra.mxu0 0.0
    %177 = vmatprep.subr.mxu0 0.0
    %178 = vmatpush1.msra.mxu0 0.0
    %179 = vmatprep.subr.mxu0 0.0
    %180 = vmatpush1.msra.mxu0 0.0
    %181 = vmatprep.subr.mxu0 0.0
    %182 = vmatpush1.msra.mxu0 0.0
    %183 = vmatprep.subr.mxu0 0.0
    %184 = vmatpush1.msra.mxu0 0.0
    %185 = vmatprep.subr.mxu0 0.0
    %186 = vmatpush1.msra.mxu0 0.0
    %187 = vmatprep.subr.mxu0 0.0
    %188 = vmatpush1.msra.mxu0 0.0
    %189 = vmatprep.subr.mxu0 0.0
    %190 = vmatpush1.msra.mxu0 0.0
    %191 = vmatprep.subr.mxu0 0.0
    %192 = vmatpush1.msra.mxu0 0.0
    %193 = vmatprep.subr.mxu0 0.0
    %194 = vmatpush1.msra.mxu0 0.0
    %195 = vmatprep.mubr.f32.mxu0 0.0
    %196 = vmatmul.mubr.f32.gmra.mrb[0].mxu0 %v129
    %v197 = vpop.f32.mrb[0].mxu0
    %v198 = vadd.f32 %v120, %v197
    %v199 = vpop.f32.mrb[0].mxu0
    %v200 = vadd.f32 %v124, %v199
    %201 = vdwg.mxu0
    %v202 = vmax.f32 %v198, 0.0
    %v203 = vmax.f32 %v200, 0.0
    %v204 = vld [vmem:[#allocation8] sm:$0xff]
    %v205 = vld [vmem:[#allocation8 + $0x8] sm:$0xff]
    %v206 = vld [vmem:[#allocation8 + $0x10] sm:$0xff]
    %v207 = vld [vmem:[#allocation8 + $0x18] sm:$0xff]
    %v208 = vld [vmem:[#allocation8 + $0x20] sm:$0xff]
    %v209 = vld [vmem:[#allocation8 + $0x28] sm:$0xff]
    %v210 = vld [vmem:[#allocation8 + $0x30] sm:$0xff]
    %v211 = vld [vmem:[#allocation8 + $0x38] sm:$0xff]
    %v212 = vld [vmem:[#allocation8 + $0x40] sm:$0xff]
    %v213 = vld [vmem:[#allocation8 + $0x48] sm:$0xff]
    %v214 = vld [vmem:[#allocation8 + $0x50] sm:$0xff]
    %v215 = vld [vmem:[#allocation8 + $0x58] sm:$0xff]
    %v216 = vld [vmem:[#allocation8 + $0x60] sm:$0xff]
    %v217 = vld [vmem:[#allocation8 + $0x68] sm:$0xff]
    %v218 = vld [vmem:[#allocation8 + $0x70] sm:$0xff]
    %v219 = vld [vmem:[#allocation8 + $0x78] sm:$0xff]
    %v220 = vld [vmem:[#allocation8 + $0x80] sm:$0xff]
    %v221 = vld [vmem:[#allocation8 + $0x88] sm:$0xff]
    %v222 = vld [vmem:[#allocation8 + $0x90] sm:$0xff]
    %v223 = vld [vmem:[#allocation8 + $0x98] sm:$0xff]
    %v224 = vld [vmem:[#allocation8 + $0xa0] sm:$0xff]
    %v225 = vld [vmem:[#allocation8 + $0xa8] sm:$0xff]
    %v226 = vld [vmem:[#allocation8 + $0xb0] sm:$0xff]
    %v227 = vld [vmem:[#allocation8 + $0xb8] sm:$0xff]
    %v228 = vld [vmem:[#allocation8 + $0xc0] sm:$0xff]
    %v229 = vld [vmem:[#allocation8 + $0xc8] sm:$0xff]
    %v230 = vld [vmem:[#allocation8 + $0xd0] sm:$0xff]
    %v231 = vld [vmem:[#allocation8 + $0xd8] sm:$0xff]
    %v232 = vld [vmem:[#allocation8 + $0xe0] sm:$0xff]
    %v233 = vld [vmem:[#allocation8 + $0xe8] sm:$0xff]
    %v234 = vld [vmem:[#allocation8 + $0xf0] sm:$0xff]
    %v235 = vld [vmem:[#allocation8 + $0xf8] sm:$0xff]
    %v236 = vld [vmem:[#allocation10] sm:$0x1]
    %v238 = vlaneseq
    %v239 = vshrl.u32 %v238, 7
    %v240 = vsub.s32 0, %v239
    %v241 = vrot.slane %v236, %v240
    %243 = vmatprep.subr.mxu0 0.0
    %244 = vmatpush1.msra.mxu0 %v204
    %245 = vmatprep.subr.mxu0 0.0
    %246 = vmatpush1.msra.mxu0 %v205
    %247 = vmatprep.subr.mxu0 0.0
    %248 = vmatpush1.msra.mxu0 %v206
    %249 = vmatprep.subr.mxu0 0.0
    %250 = vmatpush1.msra.mxu0 %v207
    %251 = vmatprep.subr.mxu0 0.0
    %252 = vmatpush1.msra.mxu0 %v208
    %253 = vmatprep.subr.mxu0 0.0
    %254 = vmatpush1.msra.mxu0 %v209
    %255 = vmatprep.subr.mxu0 0.0
    %256 = vmatpush1.msra.mxu0 %v210
    %257 = vmatprep.subr.mxu0 0.0
    %258 = vmatpush1.msra.mxu0 %v211
    %259 = vmatprep.subr.mxu0 0.0
    %260 = vmatpush1.msra.mxu0 %v212
    %261 = vmatprep.subr.mxu0 0.0
    %262 = vmatpush1.msra.mxu0 %v213
    %263 = vmatprep.subr.mxu0 0.0
    %264 = vmatpush1.msra.mxu0 %v214
    %265 = vmatprep.subr.mxu0 0.0
    %266 = vmatpush1.msra.mxu0 %v215
    %267 = vmatprep.subr.mxu0 0.0
    %268 = vmatpush1.msra.mxu0 %v216
    %269 = vmatprep.subr.mxu0 0.0
    %270 = vmatpush1.msra.mxu0 %v217
    %271 = vmatprep.subr.mxu0 0.0
    %272 = vmatpush1.msra.mxu0 %v218
    %273 = vmatprep.subr.mxu0 0.0
    %274 = vmatpush1.msra.mxu0 %v219
    %275 = vmatprep.subr.mxu0 0.0
    %276 = vmatpush1.msra.mxu0 %v220
    %277 = vmatprep.subr.mxu0 0.0
    %278 = vmatpush1.msra.mxu0 %v221
    %279 = vmatprep.subr.mxu0 0.0
    %280 = vmatpush1.msra.mxu0 %v222
    %281 = vmatprep.subr.mxu0 0.0
    %282 = vmatpush1.msra.mxu0 %v223
    %283 = vmatprep.subr.mxu0 0.0
    %284 = vmatpush1.msra.mxu0 %v224
    %285 = vmatprep.subr.mxu0 0.0
    %286 = vmatpush1.msra.mxu0 %v225
    %287 = vmatprep.subr.mxu0 0.0
    %288 = vmatpush1.msra.mxu0 %v226
    %289 = vmatprep.subr.mxu0 0.0
    %290 = vmatpush1.msra.mxu0 %v227
    %291 = vmatprep.subr.mxu0 0.0
    %292 = vmatpush1.msra.mxu0 %v228
    %293 = vmatprep.subr.mxu0 0.0
    %294 = vmatpush1.msra.mxu0 %v229
    %295 = vmatprep.subr.mxu0 0.0
    %296 = vmatpush1.msra.mxu0 %v230
    %297 = vmatprep.subr.mxu0 0.0
    %298 = vmatpush1.msra.mxu0 %v231
    %299 = vmatprep.subr.mxu0 0.0
    %300 = vmatpush1.msra.mxu0 %v232
    %301 = vmatprep.subr.mxu0 0.0
    %302 = vmatpush1.msra.mxu0 %v233
    %303 = vmatprep.subr.mxu0 0.0
    %304 = vmatpush1.msra.mxu0 %v234
    %305 = vmatprep.subr.mxu0 0.0
    %306 = vmatpush1.msra.mxu0 %v235
    %307 = vmatprep.mubr.f32.mxu0 %v203
    %308 = vmatmul.mubr.f32.gmra.mrb[0].mxu0 %v202
    %v309 = vpop.f32.mrb[0].mxu0
    %v310 = vadd.f32 %v241, %v309
    %v311 = vpop.f32.mrb[0].mxu0
    %312 = vdwg.mxu0
    %v313 = vmax.f32 %v310, 0.0
    %v314 = vld [vmem:[#allocation11] sm:$0xff]
    %v315 = vld [vmem:[#allocation11 + $0x8] sm:$0xff]
    %v316 = vld [vmem:[#allocation11 + $0x10] sm:$0xff]
    %v317 = vld [vmem:[#allocation11 + $0x18] sm:$0xff]
    %v318 = vld [vmem:[#allocation11 + $0x20] sm:$0xff]
    %v319 = vld [vmem:[#allocation11 + $0x28] sm:$0xff]
    %v320 = vld [vmem:[#allocation11 + $0x30] sm:$0xff]
    %v321 = vld [vmem:[#allocation11 + $0x38] sm:$0xff]
    %v322 = vld [vmem:[#allocation11 + $0x40] sm:$0xff]
    %v323 = vld [vmem:[#allocation11 + $0x48] sm:$0xff]
    %v324 = vld [vmem:[#allocation11 + $0x50] sm:$0xff]
    %v325 = vld [vmem:[#allocation11 + $0x58] sm:$0xff]
    %v326 = vld [vmem:[#allocation11 + $0x60] sm:$0xff]
    %v327 = vld [vmem:[#allocation11 + $0x68] sm:$0xff]
    %v328 = vld [vmem:[#allocation11 + $0x70] sm:$0xff]
    %v329 = vld [vmem:[#allocation11 + $0x78] sm:$0xff]
    %v330 = vld [vmem:[#allocation13] sm:$0x1]
    %v332 = vlaneseq
    %v333 = vshrl.u32 %v332, 7
    %v334 = vsub.s32 0, %v333
    %v335 = vrot.slane %v330, %v334
    %337 = vmatprep.subr.mxu0 0.0
    %338 = vmatpush1.msra.mxu0 %v314
    %339 = vmatprep.subr.mxu0 0.0
    %340 = vmatpush1.msra.mxu0 %v315
    %341 = vmatprep.subr.mxu0 0.0
    %342 = vmatpush1.msra.mxu0 %v316
    %343 = vmatprep.subr.mxu0 0.0
    %344 = vmatpush1.msra.mxu0 %v317
    %345 = vmatprep.subr.mxu0 0.0
    %346 = vmatpush1.msra.mxu0 %v318
    %347 = vmatprep.subr.mxu0 0.0
    %348 = vmatpush1.msra.mxu0 %v319
    %349 = vmatprep.subr.mxu0 0.0
    %350 = vmatpush1.msra.mxu0 %v320
    %351 = vmatprep.subr.mxu0 0.0
    %352 = vmatpush1.msra.mxu0 %v321
    %353 = vmatprep.subr.mxu0 0.0
    %354 = vmatpush1.msra.mxu0 %v322
    %355 = vmatprep.subr.mxu0 0.0
    %356 = vmatpush1.msra.mxu0 %v323
    %357 = vmatprep.subr.mxu0 0.0
    %358 = vmatpush1.msra.mxu0 %v324
    %359 = vmatprep.subr.mxu0 0.0
    %360 = vmatpush1.msra.mxu0 %v325
    %361 = vmatprep.subr.mxu0 0.0
    %362 = vmatpush1.msra.mxu0 %v326
    %363 = vmatprep.subr.mxu0 0.0
    %364 = vmatpush1.msra.mxu0 %v327
    %365 = vmatprep.subr.mxu0 0.0
    %366 = vmatpush1.msra.mxu0 %v328
    %367 = vmatprep.subr.mxu0 0.0
    %368 = vmatpush1.msra.mxu0 %v329
    %369 = vmatprep.subr.mxu0 0.0
    %370 = vmatpush1.msra.mxu0 0.0
    %371 = vmatprep.subr.mxu0 0.0
    %372 = vmatpush1.msra.mxu0 0.0
    %373 = vmatprep.subr.mxu0 0.0
    %374 = vmatpush1.msra.mxu0 0.0
    %375 = vmatprep.subr.mxu0 0.0
    %376 = vmatpush1.msra.mxu0 0.0
    %377 = vmatprep.subr.mxu0 0.0
    %378 = vmatpush1.msra.mxu0 0.0
    %379 = vmatprep.subr.mxu0 0.0
    %380 = vmatpush1.msra.mxu0 0.0
    %381 = vmatprep.subr.mxu0 0.0
    %382 = vmatpush1.msra.mxu0 0.0
    %383 = vmatprep.subr.mxu0 0.0
    %384 = vmatpush1.msra.mxu0 0.0
    %385 = vmatprep.subr.mxu0 0.0
    %386 = vmatpush1.msra.mxu0 0.0
    %387 = vmatprep.subr.mxu0 0.0
    %388 = vmatpush1.msra.mxu0 0.0
    %389 = vmatprep.subr.mxu0 0.0
    %390 = vmatpush1.msra.mxu0 0.0
    %391 = vmatprep.subr.mxu0 0.0
    %392 = vmatpush1.msra.mxu0 0.0
    %393 = vmatprep.subr.mxu0 0.0
    %394 = vmatpush1.msra.mxu0 0.0
    %395 = vmatprep.subr.mxu0 0.0
    %396 = vmatpush1.msra.mxu0 0.0
    %397 = vmatprep.subr.mxu0 0.0
    %398 = vmatpush1.msra.mxu0 0.0
    %399 = vmatprep.subr.mxu0 0.0
    %400 = vmatpush1.msra.mxu0 0.0
    %401 = vmatprep.mubr.f32.mxu0 0.0
    %402 = vmatmul.mubr.f32.gmra.mrb[0].mxu0 %v313
    %v403 = vpop.f32.mrb[0].mxu0
    %v404 = vadd.f32 %v335, %v403
    %v405 = vpop.f32.mrb[0].mxu0
    %406 = vdwg.mxu0
    %407 = vst [vmem:[#allocation14] sm:$0xff] %v404
    // Predicated region
    $region58: #{dqn_forward.1} parent=1 // pred_check
      _
    $region59: #{dqn_forward.1} parent=1 // pred_check_branch
      %409 = sbr.rel (0) target = $region61
    $region60: #{dqn_forward.1} parent=1 // pred_region
      %s411 = ssub.s32 128, 128
      %412 = vsyncadd [#allocation4], %s411
      %s414 = sshll.u32 [#allocation14], 4
      %s415 = int_to_ptr.vmem [resolvable:$true] %s414
      %417 = dma.vmem_to_hbm [thread:$0]  %s415, 128, %s7, [#allocation4]
    $region61: #{dqn_forward.1} parent=1 // pred_fallthru
      _
    // Predicated region
    $region62: #{dqn_forward.1} parent=1 // pred_check
      _
    $region63: #{dqn_forward.1} parent=1 // pred_check_branch
      %419 = sbr.rel (0) target = $region65
    $region64: #{dqn_forward.1} parent=1 // pred_region
      %420 = dma.done [#allocation4], 128
    $region65: #{dqn_forward.1} parent=1 // pred_fallthru
      _
    %421 = vsyncpa [#allocation3], 1
    %422 = vsyncpa [#allocation6], 1
    %423 = vsyncpa [#allocation9], 1
    %424 = vsyncpa [#allocation12], 1
    %425 = vsyncpa [#allocation4], 1

</llo_original>
